<compile_context>
chip_gen: v5e
topology: v5e:2x2
jax: 0.10.0
libtpu: 0.0.40
codegen_flags: <defaults>
</compile_context>

<pallas_src>
import functools

import jax
import jax.numpy as jnp
from jax.experimental import pallas as pl
from jax.experimental.pallas import tpu as pltpu


def _residual_ln_linear_kernel(x_ref, w_ref, b_ref, gamma_ref, beta_ref,
                               o_ref, normed_ref, *, eps, hidden, tile_n):
    """grid = (row tiles i, output-N tiles j).

    j == 0: compute LayerNorm of the resident (TM, H) x tile into a resident
    VMEM scratch.  Every j-step: one full-K MXU dot + bias + residual slice,
    written directly to the lane-dense (TM, TN) output block.
    """
    j = pl.program_id(1)

    @pl.when(j == 0)
    def _():
        x = x_ref[...].astype(jnp.float32)
        # Two-pass stats: unbiased variance, eps added to std (torch semantics).
        mean = jnp.mean(x, axis=-1, keepdims=True)
        diff = x - mean
        var = jnp.sum(diff * diff, axis=-1, keepdims=True) * (1.0 / (hidden - 1))
        inv = 1.0 / (jnp.sqrt(var) + eps)
        normed = (gamma_ref[...] * diff) * inv + beta_ref[...]
        normed_ref[...] = normed.astype(normed_ref.dtype)

    # sublayer Linear for this output slab: (TM, H) @ (H, TN), f32 accumulation.
    y = jnp.dot(normed_ref[...], w_ref[...],
                preferred_element_type=jnp.float32) + b_ref[...]
    # Dropout: inference mode => identity.
    # TODO(synk): training-mode dropout would mask `y` here via pltpu.prng_random_bits.
    start = pl.multiple_of(j * tile_n, tile_n)
    x_res = x_ref[:, pl.ds(start, tile_n)].astype(jnp.float32)
    o_ref[...] = (x_res + y).astype(o_ref.dtype)


def _vmem_budget_bytes():
    """~3/4 of physical VMEM, capped at 96 MiB (v7x: 64->48 MiB, v5e/v6e: 128->96 MiB)."""
    try:
        info = pltpu.get_tpu_info()
        cap = int(getattr(info, "vmem_capacity_bytes", 0)) or 64 * 1024 * 1024
    except Exception:
        cap = 64 * 1024 * 1024
    return min((cap * 3) // 4, 96 * 1024 * 1024)


def residual_skip_connection_with_layernorm(
        x, w, b, gamma, beta, *, eps=1e-6,
        tile_rows=None, tile_n=None,
        use_bf16_matmul=True,
        vmem_budget_bytes=None):
    """x: [..., H]; w: [H, H]; b, gamma, beta: [H]."""
    orig_shape = x.shape
    H = orig_shape[-1]
    assert H % 128 == 0, "hidden size must be a multiple of 128"
    # TODO(synk): pad H to a multiple of 128 for odd hidden sizes.

    M = 1
    for d in orig_shape[:-1]:
        M *= d
    x2d = x.reshape(M, H)

    compute_dtype = jnp.bfloat16 if use_bf16_matmul else jnp.float32
    w_c = w.astype(compute_dtype)
    b2d = b.reshape(1, H).astype(jnp.float32)
    gamma2d = gamma.reshape(1, H).astype(jnp.float32)
    beta2d = beta.reshape(1, H).astype(jnp.float32)

    x_isz = jnp.dtype(x.dtype).itemsize
    o_isz = x_isz
    c_isz = jnp.dtype(compute_dtype).itemsize

    budget = vmem_budget_bytes if vmem_budget_bytes is not None else _vmem_budget_bytes()

    # --- output-N tile: keep W fully resident (constant index_map, one DMA)
    #     when its double-buffer fits in ~half the budget; else stream slabs.
    if tile_n is None:
        tile_n = 128
        for cand in (H, 2048, 1024, 512, 256):
            if cand <= H and H % cand == 0 and 2 * cand * H * c_isz <= budget // 2:
                tile_n = cand
                break
    assert H % tile_n == 0 and tile_n % 128 == 0

    m_pad8 = ((M + 7) // 8) * 8

    # --- row tile: fill the remaining budget, MXU-aligned, keep >=2 tiles on
    #     the 'parallel' row axis when there is enough work (v7x megacore).
    if tile_rows is None:
        fixed = 2 * tile_n * H * c_isz + (tile_n + 2 * H) * 4
        per_row = H * (2 * x_isz + c_isz) + 2 * tile_n * o_isz
        avail = max(budget - fixed, per_row * 8)
        tile_rows = max(8, min(1024, avail // per_row))
        tile_rows = min(tile_rows, m_pad8)
        if tile_rows >= m_pad8 and m_pad8 >= 512:
            tile_rows = m_pad8 // 2
        if tile_rows >= 256:
            tile_rows = (tile_rows // 256) * 256
        else:
            tile_rows = max(8, (tile_rows // 8) * 8)
    assert tile_rows % 8 == 0

    m_pad = ((M + tile_rows - 1) // tile_rows) * tile_rows
    if m_pad != M:
        x2d = jnp.pad(x2d, ((0, m_pad - M), (0, 0)))

    grid = (m_pad // tile_rows, H // tile_n)

    est_vmem = (2 * tile_rows * H * x_isz            # x row tile (double-buffered)
                + 2 * tile_rows * tile_n * o_isz     # out tile (double-buffered)
                + 2 * tile_n * H * c_isz             # W slab (double-buffered)
                + tile_rows * H * c_isz              # resident LayerNorm scratch
                + 2 * (tile_n + 2 * H) * 4)          # bias / gamma / beta
    vmem_limit = int(min(budget, max(int(est_vmem * 1.25), 16 * 1024 * 1024)))

    kernel = functools.partial(_residual_ln_linear_kernel,
                               eps=eps, hidden=H, tile_n=tile_n)

    out2d = pl.pallas_call(
        kernel,
        out_shape=jax.ShapeDtypeStruct((m_pad, H), x.dtype),
        grid_spec=pltpu.PrefetchScalarGridSpec(
            num_scalar_prefetch=0,
            grid=grid,
            in_specs=[
                pl.BlockSpec((tile_rows, H), lambda i, j: (i, 0)),   # x (resident over j)
                pl.BlockSpec((H, tile_n), lambda i, j: (0, j)),      # W N-slab
                pl.BlockSpec((1, tile_n), lambda i, j: (0, j)),      # bias slab
                pl.BlockSpec((1, H), lambda i, j: (0, 0)),           # gamma (a_2)
                pl.BlockSpec((1, H), lambda i, j: (0, 0)),           # beta  (b_2)
            ],
            out_specs=pl.BlockSpec((tile_rows, tile_n), lambda i, j: (i, j)),
            scratch_shapes=[
                pltpu.VMEM((tile_rows, H), compute_dtype),   # cached LayerNorm(x)
            ],
        ),
        compiler_params=pltpu.CompilerParams(
            dimension_semantics=("parallel", "arbitrary"),
            vmem_limit_bytes=vmem_limit,
        ),
    )(x2d, w_c, b2d, gamma2d, beta2d)

    if m_pad != M:
        out2d = out2d[:M]
    return out2d.reshape(orig_shape)


def _reference(x, w, b, gamma, beta, eps=1e-6):
    xf = x.astype(jnp.float32)
    mean = jnp.mean(xf, axis=-1, keepdims=True)
    diff = xf - mean
    var = jnp.sum(diff * diff, axis=-1, keepdims=True) / (x.shape[-1] - 1)
    std = jnp.sqrt(var)
    normed = gamma * diff / (std + eps) + beta
    y = jnp.dot(normed, w.astype(jnp.float32),
                precision=jax.lax.Precision.HIGHEST) + b
    return (xf + y).astype(x.dtype)


if __name__ == "__main__":
    B, S, H = 2, 52, 256            # M = 104 rows (exercises row padding)
    key = jax.random.PRNGKey(0)
    kx, kw, kb = jax.random.split(key, 3)

    x = jax.random.normal(kx, (B, S, H), dtype=jnp.float32)

    # Deterministic parameters (LayerNorm init = ones/zeros as in the module).
    gamma = jnp.ones((H,), dtype=jnp.float32)   # a_2
    beta = jnp.zeros((H,), dtype=jnp.float32)   # b_2
    w = jax.random.normal(kw, (H, H), dtype=jnp.float32) * (1.0 / H ** 0.5)
    b = jax.random.normal(kb, (H,), dtype=jnp.float32) * 0.01

    ref = _reference(x, w, b, gamma, beta)

    # 1) f32 MXU operands, auto tiling (W fully resident, single row tile).
    #    Tolerance covers TPU default matmul precision (bf16 passes).
    out_f32 = residual_skip_connection_with_layernorm(
        x, w, b, gamma, beta, use_bf16_matmul=False)
    out_f32 = jax.block_until_ready(out_f32)
    assert out_f32.shape == (B, S, H)
    assert jnp.allclose(out_f32, ref, atol=3e-2, rtol=3e-2), "f32 path mismatch"

    # 2) bf16 MXU operands with explicit small tiles (multi-step row + N grid,
    #    exercises per-row-tile LayerNorm recompute and row padding).
    out_bf16 = residual_skip_connection_with_layernorm(
        x, w, b, gamma, beta, tile_rows=32, tile_n=128, use_bf16_matmul=True)
    out_bf16 = jax.block_until_ready(out_bf16)
    assert out_bf16.shape == (B, S, H)
    assert jnp.allclose(out_bf16, ref, atol=6e-2, rtol=6e-2), "bf16 path mismatch"

    print("KERNEL_OK")
</pallas_src>

<mosaic_0001>
module attributes {stable_mosaic.version = 11 : i64} {
  func.func @_residual_ln_linear_kernel(%arg0: i32, %arg1: i32, %arg2: memref<104x256xf32, #tpu.memory_space<vmem>>, %arg3: memref<256x256xf32, #tpu.memory_space<vmem>>, %arg4: memref<1x256xf32, #tpu.memory_space<vmem>>, %arg5: memref<1x256xf32, #tpu.memory_space<vmem>>, %arg6: memref<1x256xf32, #tpu.memory_space<vmem>>, %arg7: memref<104x256xf32, #tpu.memory_space<vmem>>, %arg8: memref<104x256xf32, #tpu.memory_space<vmem>>) attributes {dimension_semantics = [#tpu.dimension_semantics<parallel>, #tpu.dimension_semantics<arbitrary>], iteration_bounds = array<i64: 1, 1>, scalar_prefetch = 0 : i64, scratch_operands = 1 : i64, tpu.core_type = #tpu.core_type<tc>, window_params = [{transform_indices = @transform_0, window_bounds = array<i64: 104, 256>}, {transform_indices = @transform_1, window_bounds = array<i64: 256, 256>}, {transform_indices = @transform_2, window_bounds = array<i64: 1, 256>}, {pipeline_mode = #tpu.pipeline_mode<synchronous>, transform_indices = @transform_3, window_bounds = array<i64: 1, 256>}, {pipeline_mode = #tpu.pipeline_mode<synchronous>, transform_indices = @transform_4, window_bounds = array<i64: 1, 256>}, {transform_indices = @transform_5, window_bounds = array<i64: 104, 256>}]} {
    %c0_i32 = arith.constant 0 : i32
    %0 = arith.cmpi eq, %arg1, %c0_i32 : i32
    %1 = arith.extui %0 : i1 to i32
    %c0_i32_0 = arith.constant 0 : i32
    %2 = arith.cmpi ne, %1, %c0_i32_0 : i32
    scf.if %2 {
      %c0_9 = arith.constant 0 : index
      %c0_10 = arith.constant 0 : index
      %15 = vector.load %arg2[%c0_9, %c0_10] : memref<104x256xf32, #tpu.memory_space<vmem>>, vector<104x256xf32>
      %cst_11 = arith.constant dense<0.000000e+00> : vector<104xf32>
      %16 = vector.multi_reduction <add>, %15, %cst_11 [1] : vector<104x256xf32> to vector<104xf32>
      %17 = vector.shape_cast %16 : vector<104xf32> to vector<104x1xf32>
      %cst_12 = arith.constant 2.560000e+02 : f32
      %18 = vector.broadcast %cst_12 : f32 to vector<104x1xf32>
      %19 = arith.divf %17, %18 : vector<104x1xf32>
      %20 = vector.broadcast %19 : vector<104x1xf32> to vector<104x256xf32>
      %21 = arith.subf %15, %20 : vector<104x256xf32>
      %22 = arith.mulf %21, %21 : vector<104x256xf32>
      %cst_13 = arith.constant dense<0.000000e+00> : vector<104xf32>
      %23 = vector.multi_reduction <add>, %22, %cst_13 [1] : vector<104x256xf32> to vector<104xf32>
      %24 = vector.shape_cast %23 : vector<104xf32> to vector<104x1xf32>
      %cst_14 = arith.constant 0.00392156886 : f32
      %25 = vector.broadcast %cst_14 : f32 to vector<104x1xf32>
      %26 = arith.mulf %24, %25 : vector<104x1xf32>
      %27 = math.sqrt %26 : vector<104x1xf32>
      %cst_15 = arith.constant 9.99999997E-7 : f32
      %28 = vector.broadcast %cst_15 : f32 to vector<104x1xf32>
      %29 = arith.addf %27, %28 : vector<104x1xf32>
      %cst_16 = arith.constant 1.000000e+00 : f32
      %30 = vector.broadcast %cst_16 : f32 to vector<104x1xf32>
      %31 = arith.divf %30, %29 : vector<104x1xf32>
      %c0_17 = arith.constant 0 : index
      %c0_18 = arith.constant 0 : index
      %32 = vector.load %arg5[%c0_17, %c0_18] : memref<1x256xf32, #tpu.memory_space<vmem>>, vector<1x256xf32>
      %33 = vector.broadcast %32 : vector<1x256xf32> to vector<104x256xf32>
      %34 = arith.mulf %33, %21 : vector<104x256xf32>
      %35 = vector.broadcast %31 : vector<104x1xf32> to vector<104x256xf32>
      %36 = arith.mulf %34, %35 : vector<104x256xf32>
      %c0_19 = arith.constant 0 : index
      %c0_20 = arith.constant 0 : index
      %37 = vector.load %arg6[%c0_19, %c0_20] : memref<1x256xf32, #tpu.memory_space<vmem>>, vector<1x256xf32>
      %38 = vector.broadcast %37 : vector<1x256xf32> to vector<104x256xf32>
      %39 = arith.addf %36, %38 : vector<104x256xf32>
      %c0_21 = arith.constant 0 : index
      %c0_22 = arith.constant 0 : index
      %40 = vector.load %arg8[%c0_21, %c0_22] : memref<104x256xf32, #tpu.memory_space<vmem>>, vector<104x256xf32>
      tpu.vector_store %arg8[%c0_21, %c0_22], %39 {strides = array<i32>} : memref<104x256xf32, #tpu.memory_space<vmem>>, vector<104x256xf32>,
    } else {
    }
    %c0 = arith.constant 0 : index
    %c0_1 = arith.constant 0 : index
    %3 = vector.load %arg8[%c0, %c0_1] : memref<104x256xf32, #tpu.memory_space<vmem>>, vector<104x256xf32>
    %c0_2 = arith.constant 0 : index
    %c0_3 = arith.constant 0 : index
    %4 = vector.load %arg3[%c0_2, %c0_3] : memref<256x256xf32, #tpu.memory_space<vmem>>, vector<256x256xf32>
    %cst = arith.constant dense<0.000000e+00> : vector<104x256xf32>
    %5 = tpu.matmul %3, %4, %cst {dimension_numbers = #tpu.dot_dimension_numbers<[1], [0], [0], [1], [0, 0, 1, 1], [], []>} : vector<104x256xf32>, vector<256x256xf32>, vector<104x256xf32> -> vector<104x256xf32>
    %c0_4 = arith.constant 0 : index
    %c0_5 = arith.constant 0 : index
    %6 = vector.load %arg4[%c0_4, %c0_5] : memref<1x256xf32, #tpu.memory_space<vmem>>, vector<1x256xf32>
    %7 = vector.broadcast %6 : vector<1x256xf32> to vector<104x256xf32>
    %8 = arith.addf %5, %7 : vector<104x256xf32>
    %c256_i32 = arith.constant 256 : i32
    %9 = arith.muli %arg1, %c256_i32 : i32
    %10 = tpu.assume_multiple %9, 256 : i32
    %c0_6 = arith.constant 0 : index
    %11 = arith.index_cast %10 : i32 to index
    %12 = vector.load %arg2[%c0_6, %11] : memref<104x256xf32, #tpu.memory_space<vmem>>, vector<104x256xf32>
    %13 = arith.addf %12, %8 : vector<104x256xf32>
    %c0_7 = arith.constant 0 : index
    %c0_8 = arith.constant 0 : index
    %14 = vector.load %arg7[%c0_7, %c0_8] : memref<104x256xf32, #tpu.memory_space<vmem>>, vector<104x256xf32>
    tpu.vector_store %arg7[%c0_7, %c0_8], %13 {strides = array<i32>} : memref<104x256xf32, #tpu.memory_space<vmem>>, vector<104x256xf32>,
    return
  }
  func.func @transform_0(%arg0: i32, %arg1: i32) -> (i32, i32) {
    %c0_i32 = arith.constant 0 : i32
    %c0_i32_0 = arith.constant 0 : i32
    return %arg0, %c0_i32 : i32, i32
  }
  func.func @transform_1(%arg0: i32, %arg1: i32) -> (i32, i32) {
    %c0_i32 = arith.constant 0 : i32
    %c0_i32_0 = arith.constant 0 : i32
    return %c0_i32, %arg1 : i32, i32
  }
  func.func @transform_2(%arg0: i32, %arg1: i32) -> (i32, i32) {
    %c0_i32 = arith.constant 0 : i32
    %c0_i32_0 = arith.constant 0 : i32
    return %c0_i32, %arg1 : i32, i32
  }
  func.func @transform_3(%arg0: i32, %arg1: i32) -> (i32, i32) {
    %c0_i32 = arith.constant 0 : i32
    %c0_i32_0 = arith.constant 0 : i32
    %c0_i32_1 = arith.constant 0 : i32
    return %c0_i32, %c0_i32_0 : i32, i32
  }
  func.func @transform_4(%arg0: i32, %arg1: i32) -> (i32, i32) {
    %c0_i32 = arith.constant 0 : i32
    %c0_i32_0 = arith.constant 0 : i32
    %c0_i32_1 = arith.constant 0 : i32
    return %c0_i32, %c0_i32_0 : i32, i32
  }
  func.func @transform_5(%arg0: i32, %arg1: i32) -> (i32, i32) {
    %c0_i32 = arith.constant 0 : i32
    return %arg0, %arg1 : i32, i32
  }
}

</mosaic_0001>

<llo_original>
// kernel: tpu_custom_call.1
$region0: #{tpu_custom_call.1}
  #allocation0 [shape = 'u32[]', space=smem, size = 0x4, offset = 0x4, fixed_abs, tag = 'smem constant byte address 0x4 - core index']
  #allocation1 [shape = 'u32[72,128]{1,0:T(1,128)}', space=vmem, size = 0x9000, scoped, tag = 'internal scratch']
  #allocation2 [shape = 'f32[104,256]{1,0:T(8,128)}', space=vmem, size = 0x1a000, scoped, tag = 'scratch operand']
  %s0 = inlined_call_operand.hbm [shape: f32[104,256], index: 0, kind: input, shape index: {}]
  %s1 = inlined_call_operand.hbm [shape: f32[256,256], index: 1, kind: input, shape index: {}]
  %s2 = inlined_call_operand.hbm [shape: f32[1,256], index: 2, kind: input, shape index: {}]
  %s3 = inlined_call_operand.vmem [shape: f32[1,256], index: 3, kind: input, shape index: {}]
  %s4 = inlined_call_operand.hbm [shape: f32[1,256], index: 4, kind: input, shape index: {}]
  %s5 = inlined_call_operand.hbm [shape: f32[104,256], index: 5, kind: output, shape index: {}]
  %s6 = sld [smem:[#allocation0]]
  $region50: #{tpu_custom_call.1} parent=0
    _
  %s8 = ssub.s32 1, %s6
  %s9 = scalar_select 0, %s8, %s6
  $region1: #{tpu_custom_call.1} parent=0
    #allocation3 [shape = 'u8[106496]{0}', space=vmem, size = 0x1a000, scoped, tag = 'input window, operand 0, single buffered']
    #allocation4 [shape = 's32[1]{0}', space=sflag, size = 0x4, scoped, tag = 'scoped memory for tpu_custom_call.1']
    #allocation5 [shape = 's32[1]{0}', space=sflag, size = 0x4, scoped, tag = 'scoped memory for tpu_custom_call.1']
    #allocation6 [shape = 'u8[262144]{0}', space=vmem, size = 0x40000, scoped, tag = 'input window, operand 1, single buffered']
    #allocation7 [shape = 's32[1]{0}', space=sflag, size = 0x4, scoped, tag = 'scoped memory for tpu_custom_call.1']
    #allocation8 [shape = 'u8[1024]{0}', space=vmem, size = 0x400, scoped, tag = 'input window, operand 2, single buffered']
    #allocation9 [shape = 'u8[1024]{0}', space=vmem, size = 0x400, scoped, tag = 'input window, operand 4, single buffered']
    #allocation10 [shape = 's32[1]{0}', space=sflag, size = 0x4, scoped, tag = 'scoped memory for tpu_custom_call.1']
    #allocation11 [shape = 'u8[106496]{0}', space=vmem, size = 0x1a000, scoped, tag = 'output window, operand 0, single buffered']
    %10 = vsyncpa [#allocation4], 0
    %11 = vsyncpa [#allocation7], 0
    %12 = vsyncpa [#allocation10], 0
    %13 = vsyncpa [#allocation5], 0
    // Predicated region
    $region2: #{tpu_custom_call.1} parent=1 // pred_check
      _
    $region3: #{tpu_custom_call.1} parent=1 // pred_check_branch
      %15 = sbr.rel (0) target = $region5
    $region4: #{tpu_custom_call.1} parent=1 // pred_region
      %17 = vsyncadd [#allocation4], 0
      %s18 = sshll.u32 %s0, 4
      %s19 = int_to_ptr.hbm [resolvable:$true] %s18
      %s20 = sshll.u32 [#allocation3], 4
      %s21 = int_to_ptr.vmem [resolvable:$true] %s20
      %26 = dma.hbm_to_vmem [thread:$0]  %s19, 3328, %s21, [#allocation4], 256, 256, 16
    $region5: #{tpu_custom_call.1} parent=1 // pred_fallthru
      _
    // Predicated region
    $region6: #{tpu_custom_call.1} parent=1 // pred_check
      _
    $region7: #{tpu_custom_call.1} parent=1 // pred_check_branch
      %28 = sbr.rel (0) target = $region9
    $region8: #{tpu_custom_call.1} parent=1 // pred_region
      %30 = vsyncadd [#allocation7], 0
      %s31 = sshll.u32 %s1, 4
      %s32 = int_to_ptr.hbm [resolvable:$true] %s31
      %s33 = sshll.u32 [#allocation6], 4
      %s34 = int_to_ptr.vmem [resolvable:$true] %s33
      %39 = dma.hbm_to_vmem [thread:$0]  %s32, 8192, %s34, [#allocation7], 256, 256, 16
    $region9: #{tpu_custom_call.1} parent=1 // pred_fallthru
      _
    // Predicated region
    $region10: #{tpu_custom_call.1} parent=1 // pred_check
      _
    $region11: #{tpu_custom_call.1} parent=1 // pred_check_branch
      %41 = sbr.rel (0) target = $region13
    $region12: #{tpu_custom_call.1} parent=1 // pred_region
      %43 = vsyncadd [#allocation7], 0
      %s45 = sshll.u32 %s2, 4
      %s46 = int_to_ptr.hbm [resolvable:$true] %s45
      %s47 = sshll.u32 [#allocation8], 4
      %s48 = int_to_ptr.vmem [resolvable:$true] %s47
      %50 = dma.hbm_to_vmem [thread:$0]  %s46, 32, %s48, [#allocation7]
    $region13: #{tpu_custom_call.1} parent=1 // pred_fallthru
      _
    // Predicated region
    $region14: #{tpu_custom_call.1} parent=1 // pred_check
      _
    $region15: #{tpu_custom_call.1} parent=1 // pred_check_branch
      %52 = sbr.rel (0) target = $region17
    $region16: #{tpu_custom_call.1} parent=1 // pred_region
      _
    $region17: #{tpu_custom_call.1} parent=1 // pred_fallthru
      _
    // Predicated region
    $region18: #{tpu_custom_call.1} parent=1 // pred_check
      _
    $region19: #{tpu_custom_call.1} parent=1 // pred_check_branch
      %54 = sbr.rel (0) target = $region21
    $region20: #{tpu_custom_call.1} parent=1 // pred_region
      %56 = vsyncadd [#allocation10], 0
      %s58 = sshll.u32 %s4, 4
      %s59 = int_to_ptr.hbm [resolvable:$true] %s58
      %s60 = sshll.u32 [#allocation9], 4
      %s61 = int_to_ptr.vmem [resolvable:$true] %s60
      %63 = dma.hbm_to_vmem [thread:$0]  %s59, 32, %s61, [#allocation10]
    $region21: #{tpu_custom_call.1} parent=1 // pred_fallthru
      _
    // Predicated region
    $region22: #{tpu_custom_call.1} parent=1 // pred_check
      _
    $region23: #{tpu_custom_call.1} parent=1 // pred_check_branch
      %65 = sbr.rel (0) target = $region25
    $region24: #{tpu_custom_call.1} parent=1 // pred_region
      %67 = dma.done [#allocation4], 3328
    $region25: #{tpu_custom_call.1} parent=1 // pred_fallthru
      _
    // Predicated region
    $region26: #{tpu_custom_call.1} parent=1 // pred_check
      _
    $region27: #{tpu_custom_call.1} parent=1 // pred_check_branch
      %69 = sbr.rel (0) target = $region29
    $region28: #{tpu_custom_call.1} parent=1 // pred_region
      %71 = dma.done [#allocation7], 8192
    $region29: #{tpu_custom_call.1} parent=1 // pred_fallthru
      _
    // Predicated region
    $region30: #{tpu_custom_call.1} parent=1 // pred_check
      _
    $region31: #{tpu_custom_call.1} parent=1 // pred_check_branch
      %73 = sbr.rel (0) target = $region33
    $region32: #{tpu_custom_call.1} parent=1 // pred_region
      %75 = dma.done [#allocation7], 32
    $region33: #{tpu_custom_call.1} parent=1 // pred_fallthru
      _
    // Predicated region
    $region34: #{tpu_custom_call.1} parent=1 // pred_check
      _
    $region35: #{tpu_custom_call.1} parent=1 // pred_check_branch
      %77 = sbr.rel (0) target = $region37
    $region36: #{tpu_custom_call.1} parent=1 // pred_region
      %79 = dma.done [#allocation10], 32
    $region37: #{tpu_custom_call.1} parent=1 // pred_fallthru
      _
    %p80 = scmp.eq.s32.totalorder 0, 0
    // Predicated region
    $region38: #{tpu_custom_call.1} parent=1 // pred_check
      %p81 = pneg %p80
    $region39: #{tpu_custom_call.1} parent=1 // pred_check_branch
      %83 = sbr.rel (%p81) target = $region41
    $region40: #{tpu_custom_call.1} parent=1 // pred_region
      %v84 = vld [vmem:[#allocation3] sm:$0xff]
      %v85 = vld [vmem:[#allocation3 + $0x8] sm:$0xff]
      %v86 = vld [vmem:[#allocation3 + $0x10] sm:$0xff]
      %v87 = vld [vmem:[#allocation3 + $0x18] sm:$0xff]
      %v88 = vld [vmem:[#allocation3 + $0x20] sm:$0xff]
      %v89 = vld [vmem:[#allocation3 + $0x28] sm:$0xff]
      %v90 = vld [vmem:[#allocation3 + $0x30] sm:$0xff]
      %v91 = vld [vmem:[#allocation3 + $0x38] sm:$0xff]
      %v92 = vld [vmem:[#allocation3 + $0x40] sm:$0xff]
      %v93 = vld [vmem:[#allocation3 + $0x48] sm:$0xff]
      %v94 = vld [vmem:[#allocation3 + $0x50] sm:$0xff]
      %v95 = vld [vmem:[#allocation3 + $0x58] sm:$0xff]
      %v96 = vld [vmem:[#allocation3 + $0x60] sm:$0xff]
      %v97 = vld [vmem:[#allocation3 + $0x68] sm:$0xff]
      %v98 = vld [vmem:[#allocation3 + $0x70] sm:$0xff]
      %v99 = vld [vmem:[#allocation3 + $0x78] sm:$0xff]
      %v100 = vld [vmem:[#allocation3 + $0x80] sm:$0xff]
      %v101 = vld [vmem:[#allocation3 + $0x88] sm:$0xff]
      %v102 = vld [vmem:[#allocation3 + $0x90] sm:$0xff]
      %v103 = vld [vmem:[#allocation3 + $0x98] sm:$0xff]
      %v104 = vld [vmem:[#allocation3 + $0xa0] sm:$0xff]
      %v105 = vld [vmem:[#allocation3 + $0xa8] sm:$0xff]
      %v106 = vld [vmem:[#allocation3 + $0xb0] sm:$0xff]
      %v107 = vld [vmem:[#allocation3 + $0xb8] sm:$0xff]
      %v108 = vld [vmem:[#allocation3 + $0xc0] sm:$0xff]
      %v109 = vld [vmem:[#allocation3 + $0xc8] sm:$0xff]
      %v110 = vadd.f32 %v84, %v85
      %111 = vadd.xlane.f32.xlu0 %v110
      %v112 = vpop.xlane.xlu0 %111
      %v113 = vadd.f32 %v86, %v87
      %114 = vadd.xlane.f32.xlu0 %v113
      %v115 = vpop.xlane.xlu0 %114
      %v116 = vadd.f32 %v88, %v89
      %117 = vadd.xlane.f32.xlu0 %v116
      %v118 = vpop.xlane.xlu0 %117
      %v119 = vadd.f32 %v90, %v91
      %120 = vadd.xlane.f32.xlu0 %v119
      %v121 = vpop.xlane.xlu0 %120
      %v122 = vadd.f32 %v92, %v93
      %123 = vadd.xlane.f32.xlu0 %v122
      %v124 = vpop.xlane.xlu0 %123
      %v125 = vadd.f32 %v94, %v95
      %126 = vadd.xlane.f32.xlu0 %v125
      %v127 = vpop.xlane.xlu0 %126
      %v128 = vadd.f32 %v96, %v97
      %129 = vadd.xlane.f32.xlu0 %v128
      %v130 = vpop.xlane.xlu0 %129
      %v131 = vadd.f32 %v98, %v99
      %132 = vadd.xlane.f32.xlu0 %v131
      %v133 = vpop.xlane.xlu0 %132
      %v134 = vadd.f32 %v100, %v101
      %135 = vadd.xlane.f32.xlu0 %v134
      %v136 = vpop.xlane.xlu0 %135
      %v137 = vadd.f32 %v102, %v103
      %138 = vadd.xlane.f32.xlu0 %v137
      %v139 = vpop.xlane.xlu0 %138
      %v140 = vadd.f32 %v104, %v105
      %141 = vadd.xlane.f32.xlu0 %v140
      %v142 = vpop.xlane.xlu0 %141
      %v143 = vadd.f32 %v106, %v107
      %144 = vadd.xlane.f32.xlu0 %v143
      %v145 = vpop.xlane.xlu0 %144
      %v146 = vadd.f32 %v108, %v109
      %147 = vadd.xlane.f32.xlu0 %v146
      %v148 = vpop.xlane.xlu0 %147
      %v149 = vrcp.pop 256.0
      %v150 = vmul.f32 256.0, %v149
      %v151 = vsub.f32 1.0, %v150
      %v152 = vmul.f32 %v149, %v151
      %v153 = vadd.f32 %v149, %v152
      %vm154 = vweird.f32 %v149
      %v155 = vsel %vm154, %v149, %v153
      %v156 = vmul.f32 %v112, %v155
      %v157 = vmul.f32 %v115, %v155
      %v158 = vmul.f32 %v118, %v155
      %v159 = vmul.f32 %v121, %v155
      %v160 = vmul.f32 %v124, %v155
      %v161 = vmul.f32 %v127, %v155
      %v162 = vmul.f32 %v130, %v155
      %v163 = vmul.f32 %v133, %v155
      %v164 = vmul.f32 %v136, %v155
      %v165 = vmul.f32 %v139, %v155
      %v166 = vmul.f32 %v142, %v155
      %v167 = vmul.f32 %v145, %v155
      %v168 = vmul.f32 %v148, %v155
      %v169 = vsub.f32 %v84, %v156
      %v170 = vsub.f32 %v85, %v156
      %v171 = vsub.f32 %v86, %v157
      %v172 = vsub.f32 %v87, %v157
      %v173 = vsub.f32 %v88, %v158
      %v174 = vsub.f32 %v89, %v158
      %v175 = vsub.f32 %v90, %v159
      %v176 = vsub.f32 %v91, %v159
      %v177 = vsub.f32 %v92, %v160
      %v178 = vsub.f32 %v93, %v160
      %v179 = vsub.f32 %v94, %v161
      %v180 = vsub.f32 %v95, %v161
      %v181 = vsub.f32 %v96, %v162
      %v182 = vsub.f32 %v97, %v162
      %v183 = vsub.f32 %v98, %v163
      %v184 = vsub.f32 %v99, %v163
      %v185 = vsub.f32 %v100, %v164
      %v186 = vsub.f32 %v101, %v164
      %v187 = vsub.f32 %v102, %v165
      %v188 = vsub.f32 %v103, %v165
      %v189 = vsub.f32 %v104, %v166
      %v190 = vsub.f32 %v105, %v166
      %v191 = vsub.f32 %v106, %v167
      %v192 = vsub.f32 %v107, %v167
      %v193 = vsub.f32 %v108, %v168
      %v194 = vsub.f32 %v109, %v168
      %v195 = vmul.f32 %v169, %v169
      %v196 = vmul.f32 %v170, %v170
      %v197 = vmul.f32 %v171, %v171
      %v198 = vmul.f32 %v172, %v172
      %v199 = vmul.f32 %v173, %v173
      %v200 = vmul.f32 %v174, %v174
      %v201 = vmul.f32 %v175, %v175
      %v202 = vmul.f32 %v176, %v176
      %v203 = vmul.f32 %v177, %v177
      %v204 = vmul.f32 %v178, %v178
      %v205 = vmul.f32 %v179, %v179
      %v206 = vmul.f32 %v180, %v180
      %v207 = vmul.f32 %v181, %v181
      %v208 = vmul.f32 %v182, %v182
      %v209 = vmul.f32 %v183, %v183
      %v210 = vmul.f32 %v184, %v184
      %v211 = vmul.f32 %v185, %v185
      %v212 = vmul.f32 %v186, %v186
      %v213 = vmul.f32 %v187, %v187
      %v214 = vmul.f32 %v188, %v188
      %v215 = vmul.f32 %v189, %v189
      %v216 = vmul.f32 %v190, %v190
      %v217 = vmul.f32 %v191, %v191
      %v218 = vmul.f32 %v192, %v192
      %v219 = vmul.f32 %v193, %v193
      %v220 = vmul.f32 %v194, %v194
      %v221 = vadd.f32 %v195, %v196
      %222 = vadd.xlane.f32.xlu0 %v221
      %v223 = vpop.xlane.xlu0 %222
      %v224 = vadd.f32 %v197, %v198
      %225 = vadd.xlane.f32.xlu0 %v224
      %v226 = vpop.xlane.xlu0 %225
      %v227 = vadd.f32 %v199, %v200
      %228 = vadd.xlane.f32.xlu0 %v227
      %v229 = vpop.xlane.xlu0 %228
      %v230 = vadd.f32 %v201, %v202
      %231 = vadd.xlane.f32.xlu0 %v230
      %v232 = vpop.xlane.xlu0 %231
      %v233 = vadd.f32 %v203, %v204
      %234 = vadd.xlane.f32.xlu0 %v233
      %v235 = vpop.xlane.xlu0 %234
      %v236 = vadd.f32 %v205, %v206
      %237 = vadd.xlane.f32.xlu0 %v236
      %v238 = vpop.xlane.xlu0 %237
      %v239 = vadd.f32 %v207, %v208
      %240 = vadd.xlane.f32.xlu0 %v239
      %v241 = vpop.xlane.xlu0 %240
      %v242 = vadd.f32 %v209, %v210
      %243 = vadd.xlane.f32.xlu0 %v242
      %v244 = vpop.xlane.xlu0 %243
      %v245 = vadd.f32 %v211, %v212
      %246 = vadd.xlane.f32.xlu0 %v245
      %v247 = vpop.xlane.xlu0 %246
      %v248 = vadd.f32 %v213, %v214
      %249 = vadd.xlane.f32.xlu0 %v248
      %v250 = vpop.xlane.xlu0 %249
      %v251 = vadd.f32 %v215, %v216
      %252 = vadd.xlane.f32.xlu0 %v251
      %v253 = vpop.xlane.xlu0 %252
      %v254 = vadd.f32 %v217, %v218
      %255 = vadd.xlane.f32.xlu0 %v254
      %v256 = vpop.xlane.xlu0 %255
      %v257 = vadd.f32 %v219, %v220
      %258 = vadd.xlane.f32.xlu0 %v257
      %v259 = vpop.xlane.xlu0 %258
      %v260 = vmul.f32 %v223, 0.003921569
      %v261 = vmul.f32 %v226, 0.003921569
      %v262 = vmul.f32 %v229, 0.003921569
      %v263 = vmul.f32 %v232, 0.003921569
      %v264 = vmul.f32 %v235, 0.003921569
      %v265 = vmul.f32 %v238, 0.003921569
      %v266 = vmul.f32 %v241, 0.003921569
      %v267 = vmul.f32 %v244, 0.003921569
      %v268 = vmul.f32 %v247, 0.003921569
      %v269 = vmul.f32 %v250, 0.003921569
      %v270 = vmul.f32 %v253, 0.003921569
      %v271 = vmul.f32 %v256, 0.003921569
      %v272 = vmul.f32 %v259, 0.003921569
      %v273 = vrsqrt.pop %v260
      %v274 = vmul.f32 %v273, %v260
      %v275 = vmul.f32 %v274, %v273
      %v276 = vmul.f32 0.5, %v275
      %v277 = vsub.f32 1.5, %v276
      %v278 = vmul.f32 %v273, %v277
      %v279 = vmul.f32 %v260, %v278
      %vm280 = vcmp.eq.f32.partialorder %v260, inf
      %v281 = vsel %vm280, %v260, %v279
      %vm282 = vcmp.eq.f32.partialorder %v260, 0.0
      %v283 = vand.u32 %v260, 2147483648
      %v284 = vsel %vm282, %v283, %v281
      %v285 = vrsqrt.pop %v261
      %v286 = vmul.f32 %v285, %v261
      %v287 = vmul.f32 %v286, %v285
      %v288 = vmul.f32 0.5, %v287
      %v289 = vsub.f32 1.5, %v288
      %v290 = vmul.f32 %v285, %v289
      %v291 = vmul.f32 %v261, %v290
      %vm292 = vcmp.eq.f32.partialorder %v261, inf
      %v293 = vsel %vm292, %v261, %v291
      %vm294 = vcmp.eq.f32.partialorder %v261, 0.0
      %v295 = vand.u32 %v261, 2147483648
      %v296 = vsel %vm294, %v295, %v293
      %v297 = vrsqrt.pop %v262
      %v298 = vmul.f32 %v297, %v262
      %v299 = vmul.f32 %v298, %v297
      %v300 = vmul.f32 0.5, %v299
      %v301 = vsub.f32 1.5, %v300
      %v302 = vmul.f32 %v297, %v301
      %v303 = vmul.f32 %v262, %v302
      %vm304 = vcmp.eq.f32.partialorder %v262, inf
      %v305 = vsel %vm304, %v262, %v303
      %vm306 = vcmp.eq.f32.partialorder %v262, 0.0
      %v307 = vand.u32 %v262, 2147483648
      %v308 = vsel %vm306, %v307, %v305
      %v309 = vrsqrt.pop %v263
      %v310 = vmul.f32 %v309, %v263
      %v311 = vmul.f32 %v310, %v309
      %v312 = vmul.f32 0.5, %v311
      %v313 = vsub.f32 1.5, %v312
      %v314 = vmul.f32 %v309, %v313
      %v315 = vmul.f32 %v263, %v314
      %vm316 = vcmp.eq.f32.partialorder %v263, inf
      %v317 = vsel %vm316, %v263, %v315
      %vm318 = vcmp.eq.f32.partialorder %v263, 0.0
      %v319 = vand.u32 %v263, 2147483648
      %v320 = vsel %vm318, %v319, %v317
      %v321 = vrsqrt.pop %v264
      %v322 = vmul.f32 %v321, %v264
      %v323 = vmul.f32 %v322, %v321
      %v324 = vmul.f32 0.5, %v323
      %v325 = vsub.f32 1.5, %v324
      %v326 = vmul.f32 %v321, %v325
      %v327 = vmul.f32 %v264, %v326
      %vm328 = vcmp.eq.f32.partialorder %v264, inf
      %v329 = vsel %vm328, %v264, %v327
      %vm330 = vcmp.eq.f32.partialorder %v264, 0.0
      %v331 = vand.u32 %v264, 2147483648
      %v332 = vsel %vm330, %v331, %v329
      %v333 = vrsqrt.pop %v265
      %v334 = vmul.f32 %v333, %v265
      %v335 = vmul.f32 %v334, %v333
      %v336 = vmul.f32 0.5, %v335
      %v337 = vsub.f32 1.5, %v336
      %v338 = vmul.f32 %v333, %v337
      %v339 = vmul.f32 %v265, %v338
      %vm340 = vcmp.eq.f32.partialorder %v265, inf
      %v341 = vsel %vm340, %v265, %v339
      %vm342 = vcmp.eq.f32.partialorder %v265, 0.0
      %v343 = vand.u32 %v265, 2147483648
      %v344 = vsel %vm342, %v343, %v341
      %v345 = vrsqrt.pop %v266
      %v346 = vmul.f32 %v345, %v266
      %v347 = vmul.f32 %v346, %v345
      %v348 = vmul.f32 0.5, %v347
      %v349 = vsub.f32 1.5, %v348
      %v350 = vmul.f32 %v345, %v349
      %v351 = vmul.f32 %v266, %v350
      %vm352 = vcmp.eq.f32.partialorder %v266, inf
      %v353 = vsel %vm352, %v266, %v351
      %vm354 = vcmp.eq.f32.partialorder %v266, 0.0
      %v355 = vand.u32 %v266, 2147483648
      %v356 = vsel %vm354, %v355, %v353
      %v357 = vrsqrt.pop %v267
      %v358 = vmul.f32 %v357, %v267
      %v359 = vmul.f32 %v358, %v357
      %v360 = vmul.f32 0.5, %v359
      %v361 = vsub.f32 1.5, %v360
      %v362 = vmul.f32 %v357, %v361
      %v363 = vmul.f32 %v267, %v362
      %vm364 = vcmp.eq.f32.partialorder %v267, inf
      %v365 = vsel %vm364, %v267, %v363
      %vm366 = vcmp.eq.f32.partialorder %v267, 0.0
      %v367 = vand.u32 %v267, 2147483648
      %v368 = vsel %vm366, %v367, %v365
      %v369 = vrsqrt.pop %v268
      %v370 = vmul.f32 %v369, %v268
      %v371 = vmul.f32 %v370, %v369
      %v372 = vmul.f32 0.5, %v371
      %v373 = vsub.f32 1.5, %v372
      %v374 = vmul.f32 %v369, %v373
      %v375 = vmul.f32 %v268, %v374
      %vm376 = vcmp.eq.f32.partialorder %v268, inf
      %v377 = vsel %vm376, %v268, %v375
      %vm378 = vcmp.eq.f32.partialorder %v268, 0.0
      %v379 = vand.u32 %v268, 2147483648
      %v380 = vsel %vm378, %v379, %v377
      %v381 = vrsqrt.pop %v269
      %v382 = vmul.f32 %v381, %v269
      %v383 = vmul.f32 %v382, %v381
      %v384 = vmul.f32 0.5, %v383
      %v385 = vsub.f32 1.5, %v384
      %v386 = vmul.f32 %v381, %v385
      %v387 = vmul.f32 %v269, %v386
      %vm388 = vcmp.eq.f32.partialorder %v269, inf
      %v389 = vsel %vm388, %v269, %v387
      %vm390 = vcmp.eq.f32.partialorder %v269, 0.0
      %v391 = vand.u32 %v269, 2147483648
      %v392 = vsel %vm390, %v391, %v389
      %v393 = vrsqrt.pop %v270
      %v394 = vmul.f32 %v393, %v270
      %v395 = vmul.f32 %v394, %v393
      %v396 = vmul.f32 0.5, %v395
      %v397 = vsub.f32 1.5, %v396
      %v398 = vmul.f32 %v393, %v397
      %v399 = vmul.f32 %v270, %v398
      %vm400 = vcmp.eq.f32.partialorder %v270, inf
      %v401 = vsel %vm400, %v270, %v399
      %vm402 = vcmp.eq.f32.partialorder %v270, 0.0
      %v403 = vand.u32 %v270, 2147483648
      %v404 = vsel %vm402, %v403, %v401
      %v405 = vrsqrt.pop %v271
      %v406 = vmul.f32 %v405, %v271
      %v407 = vmul.f32 %v406, %v405
      %v408 = vmul.f32 0.5, %v407
      %v409 = vsub.f32 1.5, %v408
      %v410 = vmul.f32 %v405, %v409
      %v411 = vmul.f32 %v271, %v410
      %vm412 = vcmp.eq.f32.partialorder %v271, inf
      %v413 = vsel %vm412, %v271, %v411
      %vm414 = vcmp.eq.f32.partialorder %v271, 0.0
      %v415 = vand.u32 %v271, 2147483648
      %v416 = vsel %vm414, %v415, %v413
      %v417 = vrsqrt.pop %v272
      %v418 = vmul.f32 %v417, %v272
      %v419 = vmul.f32 %v418, %v417
      %v420 = vmul.f32 0.5, %v419
      %v421 = vsub.f32 1.5, %v420
      %v422 = vmul.f32 %v417, %v421
      %v423 = vmul.f32 %v272, %v422
      %vm424 = vcmp.eq.f32.partialorder %v272, inf
      %v425 = vsel %vm424, %v272, %v423
      %vm426 = vcmp.eq.f32.partialorder %v272, 0.0
      %v427 = vand.u32 %v272, 2147483648
      %v428 = vsel %vm426, %v427, %v425
      %v429 = vadd.f32 %v284, 1e-06
      %v430 = vadd.f32 %v296, 1e-06
      %v431 = vadd.f32 %v308, 1e-06
      %v432 = vadd.f32 %v320, 1e-06
      %v433 = vadd.f32 %v332, 1e-06
      %v434 = vadd.f32 %v344, 1e-06
      %v435 = vadd.f32 %v356, 1e-06
      %v436 = vadd.f32 %v368, 1e-06
      %v437 = vadd.f32 %v380, 1e-06
      %v438 = vadd.f32 %v392, 1e-06
      %v439 = vadd.f32 %v404, 1e-06
      %v440 = vadd.f32 %v416, 1e-06
      %v441 = vadd.f32 %v428, 1e-06
      %v442 = vrcp.pop %v429
      %v443 = vmul.f32 %v429, %v442
      %v444 = vsub.f32 1.0, %v443
      %v445 = vmul.f32 %v442, %v444
      %v446 = vadd.f32 %v442, %v445
      %vm447 = vweird.f32 %v429
      %vm448 = vweird.f32 %v442
      %vm449 = vmor %vm447, %vm448
      %v450 = vsel %vm449, %v442, %v446
      %v451 = vand.u32 2147483647, %v429
      %vm452 = vcmp.eq.f32.partialorder %v451, 8.507059e+37
      %v453 = vand.u32 %v429, 2147483648
      %v454 = vor.u32 1.1754944e-38, %v453
      %v455 = vsel %vm452, %v454, %v450
      %v456 = vmul.f32 1.0, %v455
      %v457 = vrcp.pop %v430
      %v458 = vmul.f32 %v430, %v457
      %v459 = vsub.f32 1.0, %v458
      %v460 = vmul.f32 %v457, %v459
      %v461 = vadd.f32 %v457, %v460
      %vm462 = vweird.f32 %v430
      %vm463 = vweird.f32 %v457
      %vm464 = vmor %vm462, %vm463
      %v465 = vsel %vm464, %v457, %v461
      %v466 = vand.u32 2147483647, %v430
      %vm467 = vcmp.eq.f32.partialorder %v466, 8.507059e+37
      %v468 = vand.u32 %v430, 2147483648
      %v469 = vor.u32 1.1754944e-38, %v468
      %v470 = vsel %vm467, %v469, %v465
      %v471 = vmul.f32 1.0, %v470
      %v472 = vrcp.pop %v431
      %v473 = vmul.f32 %v431, %v472
      %v474 = vsub.f32 1.0, %v473
      %v475 = vmul.f32 %v472, %v474
      %v476 = vadd.f32 %v472, %v475
      %vm477 = vweird.f32 %v431
      %vm478 = vweird.f32 %v472
      %vm479 = vmor %vm477, %vm478
      %v480 = vsel %vm479, %v472, %v476
      %v481 = vand.u32 2147483647, %v431
      %vm482 = vcmp.eq.f32.partialorder %v481, 8.507059e+37
      %v483 = vand.u32 %v431, 2147483648
      %v484 = vor.u32 1.1754944e-38, %v483
      %v485 = vsel %vm482, %v484, %v480
      %v486 = vmul.f32 1.0, %v485
      %v487 = vrcp.pop %v432
      %v488 = vmul.f32 %v432, %v487
      %v489 = vsub.f32 1.0, %v488
      %v490 = vmul.f32 %v487, %v489
      %v491 = vadd.f32 %v487, %v490
      %vm492 = vweird.f32 %v432
      %vm493 = vweird.f32 %v487
      %vm494 = vmor %vm492, %vm493
      %v495 = vsel %vm494, %v487, %v491
      %v496 = vand.u32 2147483647, %v432
      %vm497 = vcmp.eq.f32.partialorder %v496, 8.507059e+37
      %v498 = vand.u32 %v432, 2147483648
      %v499 = vor.u32 1.1754944e-38, %v498
      %v500 = vsel %vm497, %v499, %v495
      %v501 = vmul.f32 1.0, %v500
      %v502 = vrcp.pop %v433
      %v503 = vmul.f32 %v433, %v502
      %v504 = vsub.f32 1.0, %v503
      %v505 = vmul.f32 %v502, %v504
      %v506 = vadd.f32 %v502, %v505
      %vm507 = vweird.f32 %v433
      %vm508 = vweird.f32 %v502
      %vm509 = vmor %vm507, %vm508
      %v510 = vsel %vm509, %v502, %v506
      %v511 = vand.u32 2147483647, %v433
      %vm512 = vcmp.eq.f32.partialorder %v511, 8.507059e+37
      %v513 = vand.u32 %v433, 2147483648
      %v514 = vor.u32 1.1754944e-38, %v513
      %v515 = vsel %vm512, %v514, %v510
      %v516 = vmul.f32 1.0, %v515
      %v517 = vrcp.pop %v434
      %v518 = vmul.f32 %v434, %v517
      %v519 = vsub.f32 1.0, %v518
      %v520 = vmul.f32 %v517, %v519
      %v521 = vadd.f32 %v517, %v520
      %vm522 = vweird.f32 %v434
      %vm523 = vweird.f32 %v517
      %vm524 = vmor %vm522, %vm523
      %v525 = vsel %vm524, %v517, %v521
      %v526 = vand.u32 2147483647, %v434
      %vm527 = vcmp.eq.f32.partialorder %v526, 8.507059e+37
      %v528 = vand.u32 %v434, 2147483648
      %v529 = vor.u32 1.1754944e-38, %v528
      %v530 = vsel %vm527, %v529, %v525
      %v531 = vmul.f32 1.0, %v530
      %v532 = vrcp.pop %v435
      %v533 = vmul.f32 %v435, %v532
      %v534 = vsub.f32 1.0, %v533
      %v535 = vmul.f32 %v532, %v534
      %v536 = vadd.f32 %v532, %v535
      %vm537 = vweird.f32 %v435
      %vm538 = vweird.f32 %v532
      %vm539 = vmor %vm537, %vm538
      %v540 = vsel %vm539, %v532, %v536
      %v541 = vand.u32 2147483647, %v435
      %vm542 = vcmp.eq.f32.partialorder %v541, 8.507059e+37
      %v543 = vand.u32 %v435, 2147483648
      %v544 = vor.u32 1.1754944e-38, %v543
      %v545 = vsel %vm542, %v544, %v540
      %v546 = vmul.f32 1.0, %v545
      %v547 = vrcp.pop %v436
      %v548 = vmul.f32 %v436, %v547
      %v549 = vsub.f32 1.0, %v548
      %v550 = vmul.f32 %v547, %v549
      %v551 = vadd.f32 %v547, %v550
      %vm552 = vweird.f32 %v436
      %vm553 = vweird.f32 %v547
      %vm554 = vmor %vm552, %vm553
      %v555 = vsel %vm554, %v547, %v551
      %v556 = vand.u32 2147483647, %v436
      %vm557 = vcmp.eq.f32.partialorder %v556, 8.507059e+37
      %v558 = vand.u32 %v436, 2147483648
      %v559 = vor.u32 1.1754944e-38, %v558
      %v560 = vsel %vm557, %v559, %v555
      %v561 = vmul.f32 1.0, %v560
      %v562 = vrcp.pop %v437
      %v563 = vmul.f32 %v437, %v562
      %v564 = vsub.f32 1.0, %v563
      %v565 = vmul.f32 %v562, %v564
      %v566 = vadd.f32 %v562, %v565
      %vm567 = vweird.f32 %v437
      %vm568 = vweird.f32 %v562
      %vm569 = vmor %vm567, %vm568
      %v570 = vsel %vm569, %v562, %v566
      %v571 = vand.u32 2147483647, %v437
      %vm572 = vcmp.eq.f32.partialorder %v571, 8.507059e+37
      %v573 = vand.u32 %v437, 2147483648
      %v574 = vor.u32 1.1754944e-38, %v573
      %v575 = vsel %vm572, %v574, %v570
      %v576 = vmul.f32 1.0, %v575
      %v577 = vrcp.pop %v438
      %v578 = vmul.f32 %v438, %v577
      %v579 = vsub.f32 1.0, %v578
      %v580 = vmul.f32 %v577, %v579
      %v581 = vadd.f32 %v577, %v580
      %vm582 = vweird.f32 %v438
      %vm583 = vweird.f32 %v577
      %vm584 = vmor %vm582, %vm583
      %v585 = vsel %vm584, %v577, %v581
      %v586 = vand.u32 2147483647, %v438
      %vm587 = vcmp.eq.f32.partialorder %v586, 8.507059e+37
      %v588 = vand.u32 %v438, 2147483648
      %v589 = vor.u32 1.1754944e-38, %v588
      %v590 = vsel %vm587, %v589, %v585
      %v591 = vmul.f32 1.0, %v590
      %v592 = vrcp.pop %v439
      %v593 = vmul.f32 %v439, %v592
      %v594 = vsub.f32 1.0, %v593
      %v595 = vmul.f32 %v592, %v594
      %v596 = vadd.f32 %v592, %v595
      %vm597 = vweird.f32 %v439
      %vm598 = vweird.f32 %v592
      %vm599 = vmor %vm597, %vm598
      %v600 = vsel %vm599, %v592, %v596
      %v601 = vand.u32 2147483647, %v439
      %vm602 = vcmp.eq.f32.partialorder %v601, 8.507059e+37
      %v603 = vand.u32 %v439, 2147483648
      %v604 = vor.u32 1.1754944e-38, %v603
      %v605 = vsel %vm602, %v604, %v600
      %v606 = vmul.f32 1.0, %v605
      %v607 = vrcp.pop %v440
      %v608 = vmul.f32 %v440, %v607
      %v609 = vsub.f32 1.0, %v608
      %v610 = vmul.f32 %v607, %v609
      %v611 = vadd.f32 %v607, %v610
      %vm612 = vweird.f32 %v440
      %vm613 = vweird.f32 %v607
      %vm614 = vmor %vm612, %vm613
      %v615 = vsel %vm614, %v607, %v611
      %v616 = vand.u32 2147483647, %v440
      %vm617 = vcmp.eq.f32.partialorder %v616, 8.507059e+37
      %v618 = vand.u32 %v440, 2147483648
      %v619 = vor.u32 1.1754944e-38, %v618
      %v620 = vsel %vm617, %v619, %v615
      %v621 = vmul.f32 1.0, %v620
      %v622 = vrcp.pop %v441
      %v623 = vmul.f32 %v441, %v622
      %v624 = vsub.f32 1.0, %v623
      %v625 = vmul.f32 %v622, %v624
      %v626 = vadd.f32 %v622, %v625
      %vm627 = vweird.f32 %v441
      %vm628 = vweird.f32 %v622
      %vm629 = vmor %vm627, %vm628
      %v630 = vsel %vm629, %v622, %v626
      %v631 = vand.u32 2147483647, %v441
      %vm632 = vcmp.eq.f32.partialorder %v631, 8.507059e+37
      %v633 = vand.u32 %v441, 2147483648
      %v634 = vor.u32 1.1754944e-38, %v633
      %v635 = vsel %vm632, %v634, %v630
      %v636 = vmul.f32 1.0, %v635
      %v637 = vld [vmem:[%s3] sm:$0x3]
      %v639 = vperm.slane %v637, 0
      %v640 = vperm.slane %v637, 1
      %v643 = vmul.f32 %v639, %v169
      %v644 = vmul.f32 %v640, %v170
      %v645 = vmul.f32 %v639, %v171
      %v646 = vmul.f32 %v640, %v172
      %v647 = vmul.f32 %v639, %v173
      %v648 = vmul.f32 %v640, %v174
      %v649 = vmul.f32 %v639, %v175
      %v650 = vmul.f32 %v640, %v176
      %v651 = vmul.f32 %v639, %v177
      %v652 = vmul.f32 %v640, %v178
      %v653 = vmul.f32 %v639, %v179
      %v654 = vmul.f32 %v640, %v180
      %v655 = vmul.f32 %v639, %v181
      %v656 = vmul.f32 %v640, %v182
      %v657 = vmul.f32 %v639, %v183
      %v658 = vmul.f32 %v640, %v184
      %v659 = vmul.f32 %v639, %v185
      %v660 = vmul.f32 %v640, %v186
      %v661 = vmul.f32 %v639, %v187
      %v662 = vmul.f32 %v640, %v188
      %v663 = vmul.f32 %v639, %v189
      %v664 = vmul.f32 %v640, %v190
      %v665 = vmul.f32 %v639, %v191
      %v666 = vmul.f32 %v640, %v192
      %v667 = vmul.f32 %v639, %v193
      %v668 = vmul.f32 %v640, %v194
      %v669 = vmul.f32 %v643, %v456
      %v670 = vmul.f32 %v644, %v456
      %v671 = vmul.f32 %v645, %v471
      %v672 = vmul.f32 %v646, %v471
      %v673 = vmul.f32 %v647, %v486
      %v674 = vmul.f32 %v648, %v486
      %v675 = vmul.f32 %v649, %v501
      %v676 = vmul.f32 %v650, %v501
      %v677 = vmul.f32 %v651, %v516
      %v678 = vmul.f32 %v652, %v516
      %v679 = vmul.f32 %v653, %v531
      %v680 = vmul.f32 %v654, %v531
      %v681 = vmul.f32 %v655, %v546
      %v682 = vmul.f32 %v656, %v546
      %v683 = vmul.f32 %v657, %v561
      %v684 = vmul.f32 %v658, %v561
      %v685 = vmul.f32 %v659, %v576
      %v686 = vmul.f32 %v660, %v576
      %v687 = vmul.f32 %v661, %v591
      %v688 = vmul.f32 %v662, %v591
      %v689 = vmul.f32 %v663, %v606
      %v690 = vmul.f32 %v664, %v606
      %v691 = vmul.f32 %v665, %v621
      %v692 = vmul.f32 %v666, %v621
      %v693 = vmul.f32 %v667, %v636
      %v694 = vmul.f32 %v668, %v636
      %v695 = vld [vmem:[#allocation9] sm:$0x3]
      %v697 = vperm.slane %v695, 0
      %v698 = vperm.slane %v695, 1
      %v701 = vadd.f32 %v669, %v697
      %v702 = vadd.f32 %v670, %v698
      %v703 = vadd.f32 %v671, %v697
      %v704 = vadd.f32 %v672, %v698
      %v705 = vadd.f32 %v673, %v697
      %v706 = vadd.f32 %v674, %v698
      %v707 = vadd.f32 %v675, %v697
      %v708 = vadd.f32 %v676, %v698
      %v709 = vadd.f32 %v677, %v697
      %v710 = vadd.f32 %v678, %v698
      %v711 = vadd.f32 %v679, %v697
      %v712 = vadd.f32 %v680, %v698
      %v713 = vadd.f32 %v681, %v697
      %v714 = vadd.f32 %v682, %v698
      %v715 = vadd.f32 %v683, %v697
      %v716 = vadd.f32 %v684, %v698
      %v717 = vadd.f32 %v685, %v697
      %v718 = vadd.f32 %v686, %v698
      %v719 = vadd.f32 %v687, %v697
      %v720 = vadd.f32 %v688, %v698
      %v721 = vadd.f32 %v689, %v697
      %v722 = vadd.f32 %v690, %v698
      %v723 = vadd.f32 %v691, %v697
      %v724 = vadd.f32 %v692, %v698
      %v725 = vadd.f32 %v693, %v697
      %v726 = vadd.f32 %v694, %v698
      %727 = vst [vmem:[#allocation2] sm:$0xff] %v701
      %728 = vst [vmem:[#allocation2 + $0x8] sm:$0xff] %v702
      %729 = vst [vmem:[#allocation2 + $0x10] sm:$0xff] %v703
      %730 = vst [vmem:[#allocation2 + $0x18] sm:$0xff] %v704
      %731 = vst [vmem:[#allocation2 + $0x20] sm:$0xff] %v705
      %732 = vst [vmem:[#allocation2 + $0x28] sm:$0xff] %v706
      %733 = vst [vmem:[#allocation2 + $0x30] sm:$0xff] %v707
      %734 = vst [vmem:[#allocation2 + $0x38] sm:$0xff] %v708
      %735 = vst [vmem:[#allocation2 + $0x40] sm:$0xff] %v709
      %736 = vst [vmem:[#allocation2 + $0x48] sm:$0xff] %v710
      %737 = vst [vmem:[#allocation2 + $0x50] sm:$0xff] %v711
      %738 = vst [vmem:[#allocation2 + $0x58] sm:$0xff] %v712
      %739 = vst [vmem:[#allocation2 + $0x60] sm:$0xff] %v713
      %740 = vst [vmem:[#allocation2 + $0x68] sm:$0xff] %v714
      %741 = vst [vmem:[#allocation2 + $0x70] sm:$0xff] %v715
      %742 = vst [vmem:[#allocation2 + $0x78] sm:$0xff] %v716
      %743 = vst [vmem:[#allocation2 + $0x80] sm:$0xff] %v717
      %744 = vst [vmem:[#allocation2 + $0x88] sm:$0xff] %v718
      %745 = vst [vmem:[#allocation2 + $0x90] sm:$0xff] %v719
      %746 = vst [vmem:[#allocation2 + $0x98] sm:$0xff] %v720
      %747 = vst [vmem:[#allocation2 + $0xa0] sm:$0xff] %v721
      %748 = vst [vmem:[#allocation2 + $0xa8] sm:$0xff] %v722
      %749 = vst [vmem:[#allocation2 + $0xb0] sm:$0xff] %v723
      %750 = vst [vmem:[#allocation2 + $0xb8] sm:$0xff] %v724
      %751 = vst [vmem:[#allocation2 + $0xc0] sm:$0xff] %v725
      %752 = vst [vmem:[#allocation2 + $0xc8] sm:$0xff] %v726
    $region41: #{tpu_custom_call.1} parent=1 // pred_fallthru
      _
    %v753 = vld [vmem:[#allocation2] sm:$0xff]
    %v754 = vld [vmem:[#allocation2 + $0x8] sm:$0xff]
    %v755 = vld [vmem:[#allocation2 + $0x10] sm:$0xff]
    %v756 = vld [vmem:[#allocation2 + $0x18] sm:$0xff]
    %v757 = vld [vmem:[#allocation2 + $0x20] sm:$0xff]
    %v758 = vld [vmem:[#allocation2 + $0x28] sm:$0xff]
    %v759 = vld [vmem:[#allocation2 + $0x30] sm:$0xff]
    %v760 = vld [vmem:[#allocation2 + $0x38] sm:$0xff]
    %v761 = vld [vmem:[#allocation2 + $0x40] sm:$0xff]
    %v762 = vld [vmem:[#allocation2 + $0x48] sm:$0xff]
    %v763 = vld [vmem:[#allocation2 + $0x50] sm:$0xff]
    %v764 = vld [vmem:[#allocation2 + $0x58] sm:$0xff]
    %v765 = vld [vmem:[#allocation2 + $0x60] sm:$0xff]
    %v766 = vld [vmem:[#allocation2 + $0x68] sm:$0xff]
    %v767 = vld [vmem:[#allocation2 + $0x70] sm:$0xff]
    %v768 = vld [vmem:[#allocation2 + $0x78] sm:$0xff]
    %v769 = vld [vmem:[#allocation2 + $0x80] sm:$0xff]
    %v770 = vld [vmem:[#allocation2 + $0x88] sm:$0xff]
    %v771 = vld [vmem:[#allocation2 + $0x90] sm:$0xff]
    %v772 = vld [vmem:[#allocation2 + $0x98] sm:$0xff]
    %v773 = vld [vmem:[#allocation2 + $0xa0] sm:$0xff]
    %v774 = vld [vmem:[#allocation2 + $0xa8] sm:$0xff]
    %v775 = vld [vmem:[#allocation2 + $0xb0] sm:$0xff]
    %v776 = vld [vmem:[#allocation2 + $0xb8] sm:$0xff]
    %v777 = vld [vmem:[#allocation2 + $0xc0] sm:$0xff]
    %v778 = vld [vmem:[#allocation2 + $0xc8] sm:$0xff]
    %v779 = vld [vmem:[#allocation6] sm:$0xff]
    %v780 = vld [vmem:[#allocation6 + $0x8] sm:$0xff]
    %v781 = vld [vmem:[#allocation6 + $0x10] sm:$0xff]
    %v782 = vld [vmem:[#allocation6 + $0x18] sm:$0xff]
    %v783 = vld [vmem:[#allocation6 + $0x20] sm:$0xff]
    %v784 = vld [vmem:[#allocation6 + $0x28] sm:$0xff]
    %v785 = vld [vmem:[#allocation6 + $0x30] sm:$0xff]
    %v786 = vld [vmem:[#allocation6 + $0x38] sm:$0xff]
    %v787 = vld [vmem:[#allocation6 + $0x40] sm:$0xff]
    %v788 = vld [vmem:[#allocation6 + $0x48] sm:$0xff]
    %v789 = vld [vmem:[#allocation6 + $0x50] sm:$0xff]
    %v790 = vld [vmem:[#allocation6 + $0x58] sm:$0xff]
    %v791 = vld [vmem:[#allocation6 + $0x60] sm:$0xff]
    %v792 = vld [vmem:[#allocation6 + $0x68] sm:$0xff]
    %v793 = vld [vmem:[#allocation6 + $0x70] sm:$0xff]
    %v794 = vld [vmem:[#allocation6 + $0x78] sm:$0xff]
    %v795 = vld [vmem:[#allocation6 + $0x80] sm:$0xff]
    %v796 = vld [vmem:[#allocation6 + $0x88] sm:$0xff]
    %v797 = vld [vmem:[#allocation6 + $0x90] sm:$0xff]
    %v798 = vld [vmem:[#allocation6 + $0x98] sm:$0xff]
    %v799 = vld [vmem:[#allocation6 + $0xa0] sm:$0xff]
    %v800 = vld [vmem:[#allocation6 + $0xa8] sm:$0xff]
    %v801 = vld [vmem:[#allocation6 + $0xb0] sm:$0xff]
    %v802 = vld [vmem:[#allocation6 + $0xb8] sm:$0xff]
    %v803 = vld [vmem:[#allocation6 + $0xc0] sm:$0xff]
    %v804 = vld [vmem:[#allocation6 + $0xc8] sm:$0xff]
    %v805 = vld [vmem:[#allocation6 + $0xd0] sm:$0xff]
    %v806 = vld [vmem:[#allocation6 + $0xd8] sm:$0xff]
    %v807 = vld [vmem:[#allocation6 + $0xe0] sm:$0xff]
    %v808 = vld [vmem:[#allocation6 + $0xe8] sm:$0xff]
    %v809 = vld [vmem:[#allocation6 + $0xf0] sm:$0xff]
    %v810 = vld [vmem:[#allocation6 + $0xf8] sm:$0xff]
    %v811 = vld [vmem:[#allocation6 + $0x100] sm:$0xff]
    %v812 = vld [vmem:[#allocation6 + $0x108] sm:$0xff]
    %v813 = vld [vmem:[#allocation6 + $0x110] sm:$0xff]
    %v814 = vld [vmem:[#allocation6 + $0x118] sm:$0xff]
    %v815 = vld [vmem:[#allocation6 + $0x120] sm:$0xff]
    %v816 = vld [vmem:[#allocation6 + $0x128] sm:$0xff]
    %v817 = vld [vmem:[#allocation6 + $0x130] sm:$0xff]
    %v818 = vld [vmem:[#allocation6 + $0x138] sm:$0xff]
    %v819 = vld [vmem:[#allocation6 + $0x140] sm:$0xff]
    %v820 = vld [vmem:[#allocation6 + $0x148] sm:$0xff]
    %v821 = vld [vmem:[#allocation6 + $0x150] sm:$0xff]
    %v822 = vld [vmem:[#allocation6 + $0x158] sm:$0xff]
    %v823 = vld [vmem:[#allocation6 + $0x160] sm:$0xff]
    %v824 = vld [vmem:[#allocation6 + $0x168] sm:$0xff]
    %v825 = vld [vmem:[#allocation6 + $0x170] sm:$0xff]
    %v826 = vld [vmem:[#allocation6 + $0x178] sm:$0xff]
    %v827 = vld [vmem:[#allocation6 + $0x180] sm:$0xff]
    %v828 = vld [vmem:[#allocation6 + $0x188] sm:$0xff]
    %v829 = vld [vmem:[#allocation6 + $0x190] sm:$0xff]
    %v830 = vld [vmem:[#allocation6 + $0x198] sm:$0xff]
    %v831 = vld [vmem:[#allocation6 + $0x1a0] sm:$0xff]
    %v832 = vld [vmem:[#allocation6 + $0x1a8] sm:$0xff]
    %v833 = vld [vmem:[#allocation6 + $0x1b0] sm:$0xff]
    %v834 = vld [vmem:[#allocation6 + $0x1b8] sm:$0xff]
    %v835 = vld [vmem:[#allocation6 + $0x1c0] sm:$0xff]
    %v836 = vld [vmem:[#allocation6 + $0x1c8] sm:$0xff]
    %v837 = vld [vmem:[#allocation6 + $0x1d0] sm:$0xff]
    %v838 = vld [vmem:[#allocation6 + $0x1d8] sm:$0xff]
    %v839 = vld [vmem:[#allocation6 + $0x1e0] sm:$0xff]
    %v840 = vld [vmem:[#allocation6 + $0x1e8] sm:$0xff]
    %v841 = vld [vmem:[#allocation6 + $0x1f0] sm:$0xff]
    %v842 = vld [vmem:[#allocation6 + $0x1f8] sm:$0xff]
    %v843 = vld [vmem:[#allocation8] sm:$0x3]
    %v845 = vperm.slane %v843, 0
    %v846 = vperm.slane %v843, 1
    %849 = vmatpush.msra.mxu0 %v809
    %850 = vmatpush.msra.mxu0 %v807
    %851 = vmatpush.msra.mxu0 %v805
    %852 = vmatpush.msra.mxu0 %v803
    %853 = vmatpush.msra.mxu0 %v801
    %854 = vmatpush.msra.mxu0 %v799
    %855 = vmatpush.msra.mxu0 %v797
    %856 = vmatpush.msra.mxu0 %v795
    %857 = vmatpush.msra.mxu0 %v793
    %858 = vmatpush.msra.mxu0 %v791
    %859 = vmatpush.msra.mxu0 %v789
    %860 = vmatpush.msra.mxu0 %v787
    %861 = vmatpush.msra.mxu0 %v785
    %862 = vmatpush.msra.mxu0 %v783
    %863 = vmatpush.msra.mxu0 %v781
    %864 = vmatpush.msra.mxu0 %v779
    %865 = vmatmul.f32.gmra.mxu0 %v753
    %v866 = vpop.f32.mrf.mxu0
    %v867 = vadd.f32 %v845, %v866
    %868 = vmatmul.f32.gmra.mxu0 %v755
    %v869 = vpop.f32.mrf.mxu0
    %v870 = vadd.f32 %v845, %v869
    %871 = vmatmul.f32.gmra.mxu0 %v757
    %v872 = vpop.f32.mrf.mxu0
    %v873 = vadd.f32 %v845, %v872
    %874 = vmatmul.f32.gmra.mxu0 %v759
    %v875 = vpop.f32.mrf.mxu0
    %v876 = vadd.f32 %v845, %v875
    %877 = vmatmul.f32.gmra.mxu0 %v761
    %v878 = vpop.f32.mrf.mxu0
    %v879 = vadd.f32 %v845, %v878
    %880 = vmatmul.f32.gmra.mxu0 %v763
    %v881 = vpop.f32.mrf.mxu0
    %v882 = vadd.f32 %v845, %v881
    %883 = vmatmul.f32.gmra.mxu0 %v765
    %v884 = vpop.f32.mrf.mxu0
    %v885 = vadd.f32 %v845, %v884
    %886 = vmatmul.f32.gmra.mxu0 %v767
    %v887 = vpop.f32.mrf.mxu0
    %v888 = vadd.f32 %v845, %v887
    %889 = vmatmul.f32.gmra.mxu0 %v769
    %v890 = vpop.f32.mrf.mxu0
    %v891 = vadd.f32 %v845, %v890
    %892 = vmatmul.f32.gmra.mxu0 %v771
    %v893 = vpop.f32.mrf.mxu0
    %v894 = vadd.f32 %v845, %v893
    %895 = vmatmul.f32.gmra.mxu0 %v773
    %v896 = vpop.f32.mrf.mxu0
    %v897 = vadd.f32 %v845, %v896
    %898 = vmatmul.f32.gmra.mxu0 %v775
    %v899 = vpop.f32.mrf.mxu0
    %v900 = vadd.f32 %v845, %v899
    %901 = vmatmul.f32.gmra.mxu0 %v777
    %v902 = vpop.f32.mrf.mxu0
    %v903 = vadd.f32 %v845, %v902
    %904 = vdwg.mxu0
    %905 = vmatpush.msra.mxu0 %v841
    %906 = vmatpush.msra.mxu0 %v839
    %907 = vmatpush.msra.mxu0 %v837
    %908 = vmatpush.msra.mxu0 %v835
    %909 = vmatpush.msra.mxu0 %v833
    %910 = vmatpush.msra.mxu0 %v831
    %911 = vmatpush.msra.mxu0 %v829
    %912 = vmatpush.msra.mxu0 %v827
    %913 = vmatpush.msra.mxu0 %v825
    %914 = vmatpush.msra.mxu0 %v823
    %915 = vmatpush.msra.mxu0 %v821
    %916 = vmatpush.msra.mxu0 %v819
    %917 = vmatpush.msra.mxu0 %v817
    %918 = vmatpush.msra.mxu0 %v815
    %919 = vmatpush.msra.mxu0 %v813
    %920 = vmatpush.msra.mxu0 %v811
    %921 = vmatmul.f32.gmra.mxu0 %v754
    %v922 = vpop.f32.mrf.mxu0
    %v923 = vadd.f32 %v867, %v922
    %924 = vmatmul.f32.gmra.mxu0 %v756
    %v925 = vpop.f32.mrf.mxu0
    %v926 = vadd.f32 %v870, %v925
    %927 = vmatmul.f32.gmra.mxu0 %v758
    %v928 = vpop.f32.mrf.mxu0
    %v929 = vadd.f32 %v873, %v928
    %930 = vmatmul.f32.gmra.mxu0 %v760
    %v931 = vpop.f32.mrf.mxu0
    %v932 = vadd.f32 %v876, %v931
    %933 = vmatmul.f32.gmra.mxu0 %v762
    %v934 = vpop.f32.mrf.mxu0
    %v935 = vadd.f32 %v879, %v934
    %936 = vmatmul.f32.gmra.mxu0 %v764
    %v937 = vpop.f32.mrf.mxu0
    %v938 = vadd.f32 %v882, %v937
    %939 = vmatmul.f32.gmra.mxu0 %v766
    %v940 = vpop.f32.mrf.mxu0
    %v941 = vadd.f32 %v885, %v940
    %942 = vmatmul.f32.gmra.mxu0 %v768
    %v943 = vpop.f32.mrf.mxu0
    %v944 = vadd.f32 %v888, %v943
    %945 = vmatmul.f32.gmra.mxu0 %v770
    %v946 = vpop.f32.mrf.mxu0
    %v947 = vadd.f32 %v891, %v946
    %948 = vmatmul.f32.gmra.mxu0 %v772
    %v949 = vpop.f32.mrf.mxu0
    %v950 = vadd.f32 %v894, %v949
    %951 = vmatmul.f32.gmra.mxu0 %v774
    %v952 = vpop.f32.mrf.mxu0
    %v953 = vadd.f32 %v897, %v952
    %954 = vmatmul.f32.gmra.mxu0 %v776
    %v955 = vpop.f32.mrf.mxu0
    %v956 = vadd.f32 %v900, %v955
    %957 = vmatmul.f32.gmra.mxu0 %v778
    %v958 = vpop.f32.mrf.mxu0
    %v959 = vadd.f32 %v903, %v958
    %960 = vdwg.mxu0
    %961 = vmatpush.msra.mxu0 %v810
    %962 = vmatpush.msra.mxu0 %v808
    %963 = vmatpush.msra.mxu0 %v806
    %964 = vmatpush.msra.mxu0 %v804
    %965 = vmatpush.msra.mxu0 %v802
    %966 = vmatpush.msra.mxu0 %v800
    %967 = vmatpush.msra.mxu0 %v798
    %968 = vmatpush.msra.mxu0 %v796
    %969 = vmatpush.msra.mxu0 %v794
    %970 = vmatpush.msra.mxu0 %v792
    %971 = vmatpush.msra.mxu0 %v790
    %972 = vmatpush.msra.mxu0 %v788
    %973 = vmatpush.msra.mxu0 %v786
    %974 = vmatpush.msra.mxu0 %v784
    %975 = vmatpush.msra.mxu0 %v782
    %976 = vmatpush.msra.mxu0 %v780
    %977 = vmatmul.f32.gmra.mxu0 %v753
    %v978 = vpop.f32.mrf.mxu0
    %v979 = vadd.f32 %v846, %v978
    %980 = vmatmul.f32.gmra.mxu0 %v755
    %v981 = vpop.f32.mrf.mxu0
    %v982 = vadd.f32 %v846, %v981
    %983 = vmatmul.f32.gmra.mxu0 %v757
    %v984 = vpop.f32.mrf.mxu0
    %v985 = vadd.f32 %v846, %v984
    %986 = vmatmul.f32.gmra.mxu0 %v759
    %v987 = vpop.f32.mrf.mxu0
    %v988 = vadd.f32 %v846, %v987
    %989 = vmatmul.f32.gmra.mxu0 %v761
    %v990 = vpop.f32.mrf.mxu0
    %v991 = vadd.f32 %v846, %v990
    %992 = vmatmul.f32.gmra.mxu0 %v763
    %v993 = vpop.f32.mrf.mxu0
    %v994 = vadd.f32 %v846, %v993
    %995 = vmatmul.f32.gmra.mxu0 %v765
    %v996 = vpop.f32.mrf.mxu0
    %v997 = vadd.f32 %v846, %v996
    %998 = vmatmul.f32.gmra.mxu0 %v767
    %v999 = vpop.f32.mrf.mxu0
    %v1000 = vadd.f32 %v846, %v999
    %1001 = vmatmul.f32.gmra.mxu0 %v769
    %v1002 = vpop.f32.mrf.mxu0
    %v1003 = vadd.f32 %v846, %v1002
    %1004 = vmatmul.f32.gmra.mxu0 %v771
    %v1005 = vpop.f32.mrf.mxu0
    %v1006 = vadd.f32 %v846, %v1005
    %1007 = vmatmul.f32.gmra.mxu0 %v773
    %v1008 = vpop.f32.mrf.mxu0
    %v1009 = vadd.f32 %v846, %v1008
    %1010 = vmatmul.f32.gmra.mxu0 %v775
    %v1011 = vpop.f32.mrf.mxu0
    %v1012 = vadd.f32 %v846, %v1011
    %1013 = vmatmul.f32.gmra.mxu0 %v777
    %v1014 = vpop.f32.mrf.mxu0
    %v1015 = vadd.f32 %v846, %v1014
    %1016 = vdwg.mxu0
    %1017 = vmatpush.msra.mxu0 %v842
    %1018 = vmatpush.msra.mxu0 %v840
    %1019 = vmatpush.msra.mxu0 %v838
    %1020 = vmatpush.msra.mxu0 %v836
    %1021 = vmatpush.msra.mxu0 %v834
    %1022 = vmatpush.msra.mxu0 %v832
    %1023 = vmatpush.msra.mxu0 %v830
    %1024 = vmatpush.msra.mxu0 %v828
    %1025 = vmatpush.msra.mxu0 %v826
    %1026 = vmatpush.msra.mxu0 %v824
    %1027 = vmatpush.msra.mxu0 %v822
    %1028 = vmatpush.msra.mxu0 %v820
    %1029 = vmatpush.msra.mxu0 %v818
    %1030 = vmatpush.msra.mxu0 %v816
    %1031 = vmatpush.msra.mxu0 %v814
    %1032 = vmatpush.msra.mxu0 %v812
    %1033 = vmatmul.f32.gmra.mxu0 %v754
    %v1034 = vpop.f32.mrf.mxu0
    %v1035 = vadd.f32 %v979, %v1034
    %1036 = vmatmul.f32.gmra.mxu0 %v756
    %v1037 = vpop.f32.mrf.mxu0
    %v1038 = vadd.f32 %v982, %v1037
    %1039 = vmatmul.f32.gmra.mxu0 %v758
    %v1040 = vpop.f32.mrf.mxu0
    %v1041 = vadd.f32 %v985, %v1040
    %1042 = vmatmul.f32.gmra.mxu0 %v760
    %v1043 = vpop.f32.mrf.mxu0
    %v1044 = vadd.f32 %v988, %v1043
    %1045 = vmatmul.f32.gmra.mxu0 %v762
    %v1046 = vpop.f32.mrf.mxu0
    %v1047 = vadd.f32 %v991, %v1046
    %1048 = vmatmul.f32.gmra.mxu0 %v764
    %v1049 = vpop.f32.mrf.mxu0
    %v1050 = vadd.f32 %v994, %v1049
    %1051 = vmatmul.f32.gmra.mxu0 %v766
    %v1052 = vpop.f32.mrf.mxu0
    %v1053 = vadd.f32 %v997, %v1052
    %1054 = vmatmul.f32.gmra.mxu0 %v768
    %v1055 = vpop.f32.mrf.mxu0
    %v1056 = vadd.f32 %v1000, %v1055
    %1057 = vmatmul.f32.gmra.mxu0 %v770
    %v1058 = vpop.f32.mrf.mxu0
    %v1059 = vadd.f32 %v1003, %v1058
    %1060 = vmatmul.f32.gmra.mxu0 %v772
    %v1061 = vpop.f32.mrf.mxu0
    %v1062 = vadd.f32 %v1006, %v1061
    %1063 = vmatmul.f32.gmra.mxu0 %v774
    %v1064 = vpop.f32.mrf.mxu0
    %v1065 = vadd.f32 %v1009, %v1064
    %1066 = vmatmul.f32.gmra.mxu0 %v776
    %v1067 = vpop.f32.mrf.mxu0
    %v1068 = vadd.f32 %v1012, %v1067
    %1069 = vmatmul.f32.gmra.mxu0 %v778
    %v1070 = vpop.f32.mrf.mxu0
    %v1071 = vadd.f32 %v1015, %v1070
    %1072 = vdwg.mxu0
    %s1073 = smul.u32 0, 256
    %s1074 = sshra.s32 %s1073, 7
    %s1075 = sand.u32 %s1073, 127
    %s1076 = smul.addr %s1074, 8
    %s1077 = scalar_lea.vmem [#allocation3], %s1076
    %v1078 = vld [vmem:[%s1077] sm:$0xff]
    %v1079 = vld [vmem:[%s1077 + $0x8] sm:$0xff]
    %v1080 = vld [vmem:[%s1077 + $0x10] sm:$0xff]
    %v1081 = vld [vmem:[%s1077 + $0x18] sm:$0xff]
    %v1082 = vld [vmem:[%s1077 + $0x20] sm:$0xff]
    %v1083 = vld [vmem:[%s1077 + $0x28] sm:$0xff]
    %v1084 = vld [vmem:[%s1077 + $0x30] sm:$0xff]
    %v1085 = vld [vmem:[%s1077 + $0x38] sm:$0xff]
    %v1086 = vld [vmem:[%s1077 + $0x40] sm:$0xff]
    %v1087 = vld [vmem:[%s1077 + $0x48] sm:$0xff]
    %v1088 = vld [vmem:[%s1077 + $0x50] sm:$0xff]
    %v1089 = vld [vmem:[%s1077 + $0x58] sm:$0xff]
    %v1090 = vld [vmem:[%s1077 + $0x60] sm:$0xff]
    %v1091 = vld [vmem:[%s1077 + $0x68] sm:$0xff]
    %v1092 = vld [vmem:[%s1077 + $0x70] sm:$0xff]
    %v1093 = vld [vmem:[%s1077 + $0x78] sm:$0xff]
    %v1094 = vld [vmem:[%s1077 + $0x80] sm:$0xff]
    %v1095 = vld [vmem:[%s1077 + $0x88] sm:$0xff]
    %v1096 = vld [vmem:[%s1077 + $0x90] sm:$0xff]
    %v1097 = vld [vmem:[%s1077 + $0x98] sm:$0xff]
    %v1098 = vld [vmem:[%s1077 + $0xa0] sm:$0xff]
    %v1099 = vld [vmem:[%s1077 + $0xa8] sm:$0xff]
    %v1100 = vld [vmem:[%s1077 + $0xb0] sm:$0xff]
    %v1101 = vld [vmem:[%s1077 + $0xb8] sm:$0xff]
    %v1102 = vld [vmem:[%s1077 + $0xc0] sm:$0xff]
    %v1103 = vld [vmem:[%s1077 + $0xc8] sm:$0xff]
    %v1104 = vadd.f32 %v1078, %v923
    %v1105 = vadd.f32 %v1079, %v1035
    %v1106 = vadd.f32 %v1080, %v926
    %v1107 = vadd.f32 %v1081, %v1038
    %v1108 = vadd.f32 %v1082, %v929
    %v1109 = vadd.f32 %v1083, %v1041
    %v1110 = vadd.f32 %v1084, %v932
    %v1111 = vadd.f32 %v1085, %v1044
    %v1112 = vadd.f32 %v1086, %v935
    %v1113 = vadd.f32 %v1087, %v1047
    %v1114 = vadd.f32 %v1088, %v938
    %v1115 = vadd.f32 %v1089, %v1050
    %v1116 = vadd.f32 %v1090, %v941
    %v1117 = vadd.f32 %v1091, %v1053
    %v1118 = vadd.f32 %v1092, %v944
    %v1119 = vadd.f32 %v1093, %v1056
    %v1120 = vadd.f32 %v1094, %v947
    %v1121 = vadd.f32 %v1095, %v1059
    %v1122 = vadd.f32 %v1096, %v950
    %v1123 = vadd.f32 %v1097, %v1062
    %v1124 = vadd.f32 %v1098, %v953
    %v1125 = vadd.f32 %v1099, %v1065
    %v1126 = vadd.f32 %v1100, %v956
    %v1127 = vadd.f32 %v1101, %v1068
    %v1128 = vadd.f32 %v1102, %v959
    %v1129 = vadd.f32 %v1103, %v1071
    %1130 = vst [vmem:[#allocation11] sm:$0xff] %v1104
    %1131 = vst [vmem:[#allocation11 + $0x8] sm:$0xff] %v1105
    %1132 = vst [vmem:[#allocation11 + $0x10] sm:$0xff] %v1106
    %1133 = vst [vmem:[#allocation11 + $0x18] sm:$0xff] %v1107
    %1134 = vst [vmem:[#allocation11 + $0x20] sm:$0xff] %v1108
    %1135 = vst [vmem:[#allocation11 + $0x28] sm:$0xff] %v1109
    %1136 = vst [vmem:[#allocation11 + $0x30] sm:$0xff] %v1110
    %1137 = vst [vmem:[#allocation11 + $0x38] sm:$0xff] %v1111
    %1138 = vst [vmem:[#allocation11 + $0x40] sm:$0xff] %v1112
    %1139 = vst [vmem:[#allocation11 + $0x48] sm:$0xff] %v1113
    %1140 = vst [vmem:[#allocation11 + $0x50] sm:$0xff] %v1114
    %1141 = vst [vmem:[#allocation11 + $0x58] sm:$0xff] %v1115
    %1142 = vst [vmem:[#allocation11 + $0x60] sm:$0xff] %v1116
    %1143 = vst [vmem:[#allocation11 + $0x68] sm:$0xff] %v1117
    %1144 = vst [vmem:[#allocation11 + $0x70] sm:$0xff] %v1118
    %1145 = vst [vmem:[#allocation11 + $0x78] sm:$0xff] %v1119
    %1146 = vst [vmem:[#allocation11 + $0x80] sm:$0xff] %v1120
    %1147 = vst [vmem:[#allocation11 + $0x88] sm:$0xff] %v1121
    %1148 = vst [vmem:[#allocation11 + $0x90] sm:$0xff] %v1122
    %1149 = vst [vmem:[#allocation11 + $0x98] sm:$0xff] %v1123
    %1150 = vst [vmem:[#allocation11 + $0xa0] sm:$0xff] %v1124
    %1151 = vst [vmem:[#allocation11 + $0xa8] sm:$0xff] %v1125
    %1152 = vst [vmem:[#allocation11 + $0xb0] sm:$0xff] %v1126
    %1153 = vst [vmem:[#allocation11 + $0xb8] sm:$0xff] %v1127
    %1154 = vst [vmem:[#allocation11 + $0xc0] sm:$0xff] %v1128
    %1155 = vst [vmem:[#allocation11 + $0xc8] sm:$0xff] %v1129
    // Predicated region
    $region42: #{tpu_custom_call.1} parent=1 // pred_check
      _
    $region43: #{tpu_custom_call.1} parent=1 // pred_check_branch
      %1157 = sbr.rel (0) target = $region45
    $region44: #{tpu_custom_call.1} parent=1 // pred_region
      %1159 = vsyncadd [#allocation5], 0
      %s1160 = sshll.u32 [#allocation11], 4
      %s1161 = int_to_ptr.vmem [resolvable:$true] %s1160
      %s1162 = sshll.u32 %s5, 4
      %s1163 = int_to_ptr.hbm [resolvable:$true] %s1162
      %1168 = dma.vmem_to_hbm [thread:$0]  %s1161, 3328, %s1163, [#allocation5], 256, 256, 16
    $region45: #{tpu_custom_call.1} parent=1 // pred_fallthru
      _
    // Predicated region
    $region46: #{tpu_custom_call.1} parent=1 // pred_check
      _
    $region47: #{tpu_custom_call.1} parent=1 // pred_check_branch
      %1170 = sbr.rel (0) target = $region49
    $region48: #{tpu_custom_call.1} parent=1 // pred_region
      %1172 = dma.done [#allocation5], 3328
    $region49: #{tpu_custom_call.1} parent=1 // pred_fallthru
      _
    %1173 = vsyncpa [#allocation4], 1
    %1174 = vsyncpa [#allocation7], 1
    %1175 = vsyncpa [#allocation10], 1
    %1176 = vsyncpa [#allocation5], 1

</llo_original>
